<compile_context>
chip_gen: v5e
topology: v5e:2x2
jax: 0.10.0
libtpu: 0.0.40
codegen_flags: <defaults>
</compile_context>

<pallas_src>
import functools

import jax
import jax.numpy as jnp
from jax.experimental import pallas as pl
from jax.experimental.pallas import tpu as pltpu


def _round_up(x, m):
    return (x + m - 1) // m * m


def _vmem_limit_bytes():
    """Per-chip VMEM budget: ~3/4 of physical, capped at 100 MiB."""
    try:
        info = pltpu.get_tpu_info()
        cap = int(getattr(info, "vmem_capacity_bytes", 64 << 20))
    except Exception:
        cap = 64 << 20  # conservative default (v7x physical VMEM per TC)
    return min(cap * 3 // 4, 100 << 20)


# -----------------------------------------------------------------------------
# Kernel 1: row+K tiled aggregation  out = act(A @ Z + b)
# -----------------------------------------------------------------------------
def _aggregate_kernel(a_ref, z_ref, b_ref, o_ref, acc_ref, *, relu):
    """a_ref: (tm, tk)  z_ref: (tk, F)  b_ref: (1, F) f32  o_ref: (tm, F)."""
    @pl.when(pl.program_id(1) == 0)
    def _():
        acc_ref[...] = jnp.zeros_like(acc_ref)

    acc_ref[...] += jnp.dot(a_ref[...], z_ref[...],
                            preferred_element_type=jnp.float32)

    @pl.when(pl.program_id(1) == pl.num_programs(1) - 1)
    def _():
        h = acc_ref[...] + b_ref[...]
        if relu:
            h = jnp.maximum(h, 0.0)
        o_ref[...] = h.astype(o_ref.dtype)


def _aggregate(a_p, z, b, *, tm, tk, relu, out_dtype, vmem_limit):
    n_rpad, n_cpad = a_p.shape
    f = z.shape[1]
    grid = (n_rpad // tm, n_cpad // tk)
    kernel = functools.partial(_aggregate_kernel, relu=relu)
    return pl.pallas_call(
        kernel,
        out_shape=jax.ShapeDtypeStruct((n_rpad, f), out_dtype),
        grid=grid,
        in_specs=[
            # A_hat row/K tiles: the dominant HBM stream (double-buffered).
            pl.BlockSpec((tm, tk), lambda i, k: (i, k)),
            # Z tiles along K.
            pl.BlockSpec((tk, f), lambda i, k: (k, 0)),
            # Bias: resident.
            pl.BlockSpec((1, f), lambda i, k: (0, 0)),
        ],
        out_specs=pl.BlockSpec((tm, f), lambda i, k: (i, 0)),
        scratch_shapes=[pltpu.VMEM((tm, f), jnp.float32)],
        compiler_params=pltpu.CompilerParams(
            dimension_semantics=("parallel", "arbitrary"),
            vmem_limit_bytes=vmem_limit,
        ),
    )(a_p, z, b)


# -----------------------------------------------------------------------------
# Kernel 2: small-graph fused two-layer path, A_hat resident in VMEM.
# -----------------------------------------------------------------------------
def _fused_two_layer_kernel(a_ref, z1_ref, w2_ref, b1_ref, b2_ref, o_ref):
    """out = A @ ((relu(A @ Z1 + b1)) @ W2) + b2, all blocks resident."""
    h = jnp.dot(a_ref[...], z1_ref[...], preferred_element_type=jnp.float32)
    h = jnp.maximum(h + b1_ref[...], 0.0)
    z2 = jnp.dot(h.astype(w2_ref.dtype), w2_ref[...],
                 preferred_element_type=jnp.float32)
    out = jnp.dot(a_ref[...], z2.astype(a_ref.dtype),
                  preferred_element_type=jnp.float32)
    o_ref[...] = (out + b2_ref[...]).astype(o_ref.dtype)


def _fused_fits(n_pad, f1, f2, isz, vmem_limit):
    total = (n_pad * n_pad * isz          # A (resident, single buffer)
             + n_pad * f1 * isz           # Z1
             + f1 * f2 * isz              # W2
             + n_pad * f1 * 4             # f32 H intermediate
             + n_pad * f2 * 4             # f32 Z2 intermediate
             + n_pad * f2 * isz)          # output
    return total <= vmem_limit // 2


# -----------------------------------------------------------------------------
# Tile selection for the tiled path (consistent VMEM math).
# -----------------------------------------------------------------------------
def _pick_tiles(n, f_max, isz, out_isz, budget, tm_max, tk_max):
    n_cpad = _round_up(n, 128)

    tk_cands = [t for t in range(128, min(tk_max, n_cpad) + 1, 128)
                if n_cpad % t == 0]
    if not tk_cands:
        tk_cands = [128]

    if n <= tm_max:
        tm_cands = [_round_up(n, 8)]
    elif tm_max >= 256:
        tm_cands = list(range(256, tm_max + 1, 256)) + [128]
    else:
        tm_cands = [_round_up(tm_max, 8)]

    def footprint(tm, tk):
        return (2 * tm * tk * isz          # A tiles, double-buffered
                + 2 * tk * f_max * isz     # Z tiles, double-buffered
                + tm * f_max * 4           # f32 accumulator scratch
                + 2 * tm * f_max * out_isz  # output tiles, double-buffered
                + 2 * 8 * f_max * 4)       # bias (padded), double-buffered

    best = None
    for tm in tm_cands:
        for tk in tk_cands:
            if footprint(tm, tk) > budget:
                continue
            score = (min(tm, tk), tm * tk, tm)
            if best is None or score > best[0]:
                best = (score, tm, tk)
    if best is not None:
        return best[1], best[2]
    return min(tm_cands), min(tk_cands)


# -----------------------------------------------------------------------------
# Wrapper: (model1(x) + model2(x)) / 2 for the two fused GCN members.
# -----------------------------------------------------------------------------
def average_ensemble(a_hat, x, params1, params2, *, compute_dtype=jnp.bfloat16,
                     tm_max=512, tk_max=1024, force_tiled=False):
    """params{1,2} = (W1 [F,H], b1 [1,H], W2 [H,C], b2 [1,C])."""
    n = x.shape[0]
    hid = params1[0].shape[1]
    c = params1[2].shape[1]
    isz = jnp.dtype(compute_dtype).itemsize

    # ---- algebraic fusion of the two ensemble members (exact) ----
    w1 = jnp.concatenate([params1[0], params2[0]], axis=1)        # [F, 2H]
    b1 = jnp.concatenate([params1[1], params2[1]], axis=1)        # [1, 2H]
    w2 = jnp.concatenate([params1[2], params2[2]], axis=0) * 0.5  # [2H, C]
    b2 = (params1[3] + params2[3]) * 0.5                          # [1, C]

    # ---- lane-dense feature padding (multiples of 128, exact) ----
    h2 = 2 * hid
    h_pad = _round_up(h2, 128)
    c_pad = _round_up(c, 128)
    w1 = jnp.pad(w1, ((0, 0), (0, h_pad - h2))).astype(compute_dtype)
    b1 = jnp.pad(b1, ((0, 0), (0, h_pad - h2))).astype(jnp.float32)
    w2 = jnp.pad(w2, ((0, h_pad - h2), (0, c_pad - c))).astype(compute_dtype)
    b2 = jnp.pad(b2, ((0, 0), (0, c_pad - c))).astype(jnp.float32)

    vmem_limit = _vmem_limit_bytes()

    # ---- hoisted layer-1 feature transform (tiny matmul, plain XLA) ----
    z1 = jnp.dot(x.astype(compute_dtype), w1,
                 preferred_element_type=jnp.float32).astype(compute_dtype)

    # ---- small/medium-graph fast path: A_hat resident, one pallas_call ----
    n_sq = _round_up(n, 128)
    if not force_tiled and _fused_fits(n_sq, h_pad, c_pad, isz, vmem_limit):
        # Square padding keeps A@(...(A@Z1)...) shape-consistent; padded A
        # rows/cols are zero, so padded H rows never contribute (exact).
        a_p = jnp.pad(a_hat, ((0, n_sq - n), (0, n_sq - n))).astype(compute_dtype)
        z1p = jnp.pad(z1, ((0, n_sq - n), (0, 0)))
        out = pl.pallas_call(
            _fused_two_layer_kernel,
            out_shape=jax.ShapeDtypeStruct((n_sq, c_pad), compute_dtype),
            compiler_params=pltpu.CompilerParams(vmem_limit_bytes=vmem_limit),
        )(a_p, z1p, w2, b1, b2)
        return out[:n, :c].astype(jnp.float32)

    # ---- general tiled path: two aggregation calls with K accumulation ----
    tm, tk = _pick_tiles(n, max(h_pad, c_pad), isz, isz,
                         budget=(vmem_limit * 4) // 5,
                         tm_max=tm_max, tk_max=tk_max)
    n_rpad = _round_up(n, tm)       # row dim: multiple of the row tile only
    n_cpad = _round_up(n, 128)      # K dim: multiple of 128 (tk divides it)

    # Zero padding is exact: padded A columns are zero, so padded Z rows never
    # contribute; padded output rows are sliced off below.
    a_p = jnp.pad(a_hat, ((0, n_rpad - n), (0, n_cpad - n))).astype(compute_dtype)
    z1p = jnp.pad(z1, ((0, n_cpad - n), (0, 0)))

    # Layer 1 (both members fused):  H = relu(A @ Z1 + b1f)
    h = _aggregate(a_p, z1p, b1, tm=tm, tk=tk, relu=True,
                   out_dtype=compute_dtype, vmem_limit=vmem_limit)

    # Hoisted layer-2 feature transform: Z2 = H @ (0.5 * W2f)  (tiny matmul).
    z2 = jnp.dot(h, w2, preferred_element_type=jnp.float32).astype(compute_dtype)
    if z2.shape[0] < n_cpad:
        z2 = jnp.pad(z2, ((0, n_cpad - z2.shape[0]), (0, 0)))
    else:
        z2 = z2[:n_cpad]

    # Layer 2 + averaging:  out = A @ Z2 + 0.5*(b2_1 + b2_2)
    out = _aggregate(a_p, z2, b2, tm=tm, tk=tk, relu=False,
                     out_dtype=compute_dtype, vmem_limit=vmem_limit)
    return out[:n, :c].astype(jnp.float32)


# -----------------------------------------------------------------------------
# Reference + demo
# -----------------------------------------------------------------------------
def _make_params(key, f_in, hidden, c_out):
    k1, k2, k3, k4 = jax.random.split(key, 4)
    w1 = jax.random.normal(k1, (f_in, hidden), jnp.float32) * (1.0 / jnp.sqrt(f_in))
    b1 = jax.random.normal(k2, (1, hidden), jnp.float32) * 0.01
    w2 = jax.random.normal(k3, (hidden, c_out), jnp.float32) * (1.0 / jnp.sqrt(hidden))
    b2 = jax.random.normal(k4, (1, c_out), jnp.float32) * 0.01
    return (w1, b1, w2, b2)


def _reference(a_hat, x, p1, p2):
    def gcn2(p):
        w1, b1, w2, b2 = p
        h = jnp.maximum(a_hat @ (x @ w1) + b1, 0.0)
        return a_hat @ (h @ w2) + b2
    return (gcn2(p1) + gcn2(p2)) / 2.0


def _make_graph(key, n):
    k_x, k_adj = jax.random.split(key, 2)
    x = jax.random.normal(k_x, (n, 16), jnp.float32)
    adj_raw = (jax.random.uniform(k_adj, (n, n)) < 0.15).astype(jnp.float32)
    adj = jnp.maximum(adj_raw, adj_raw.T) + jnp.eye(n, dtype=jnp.float32)
    deg_inv_sqrt = 1.0 / jnp.sqrt(adj.sum(axis=1))
    a_hat = adj * deg_inv_sqrt[:, None] * deg_inv_sqrt[None, :]
    return a_hat, x


if __name__ == "__main__":
    N, F_IN, HID, C = 32, 16, 32, 8

    key = jax.random.PRNGKey(0)
    k_g1, k_g2, k_m1, k_m2 = jax.random.split(key, 4)

    params1 = _make_params(k_m1, F_IN, HID, C)
    params2 = _make_params(k_m2, F_IN, HID, C)

    # --- small graph: fused single-call path (A_hat resident in VMEM) ---
    a_hat, x = _make_graph(k_g1, N)
    ref = _reference(a_hat, x, params1, params2)

    out_f32 = average_ensemble(a_hat, x, params1, params2,
                               compute_dtype=jnp.float32)
    out_f32 = jax.block_until_ready(out_f32)
    assert out_f32.shape == (N, C)
    assert jnp.allclose(out_f32, ref, atol=1e-4, rtol=1e-4)

    out_bf16 = average_ensemble(a_hat, x, params1, params2)  # bf16 fast path
    out_bf16 = jax.block_until_ready(out_bf16)
    assert out_bf16.shape == (N, C)
    assert jnp.allclose(out_bf16, ref, atol=3e-2, rtol=3e-2)

    # --- larger graph, forced tiled path: exercises the row x K grid with the
    #     f32 VMEM accumulator (tm=tk=128 -> 3x3 grid at N=300) ---
    N2 = 300
    a_hat2, x2 = _make_graph(k_g2, N2)
    ref2 = _reference(a_hat2, x2, params1, params2)
    out_tiled = average_ensemble(a_hat2, x2, params1, params2,
                                 compute_dtype=jnp.float32,
                                 tm_max=128, tk_max=128, force_tiled=True)
    out_tiled = jax.block_until_ready(out_tiled)
    assert out_tiled.shape == (N2, C)
    assert jnp.allclose(out_tiled, ref2, atol=1e-4, rtol=1e-4)

    print("KERNEL_OK")
</pallas_src>

<mosaic_0001>
module attributes {stable_mosaic.version = 11 : i64} {
  func.func @_fused_two_layer_kernel(%arg0: memref<128x128xf32, #tpu.memory_space<vmem>>, %arg1: memref<128x128xf32, #tpu.memory_space<vmem>>, %arg2: memref<128x128xf32, #tpu.memory_space<vmem>>, %arg3: memref<1x128xf32, #tpu.memory_space<vmem>>, %arg4: memref<1x128xf32, #tpu.memory_space<vmem>>, %arg5: memref<128x128xf32, #tpu.memory_space<vmem>>) attributes {dimension_semantics = [], scalar_prefetch = 0 : i64, scratch_operands = 0 : i64, tpu.core_type = #tpu.core_type<tc>} {
    %c0 = arith.constant 0 : index
    %c0_0 = arith.constant 0 : index
    %0 = vector.load %arg0[%c0, %c0_0] : memref<128x128xf32, #tpu.memory_space<vmem>>, vector<128x128xf32>
    %c0_1 = arith.constant 0 : index
    %c0_2 = arith.constant 0 : index
    %1 = vector.load %arg1[%c0_1, %c0_2] : memref<128x128xf32, #tpu.memory_space<vmem>>, vector<128x128xf32>
    %cst = arith.constant dense<0.000000e+00> : vector<128x128xf32>
    %2 = tpu.matmul %0, %1, %cst {dimension_numbers = #tpu.dot_dimension_numbers<[1], [0], [0], [1], [0, 0, 1, 1], [], []>} : vector<128x128xf32>, vector<128x128xf32>, vector<128x128xf32> -> vector<128x128xf32>
    %c0_3 = arith.constant 0 : index
    %c0_4 = arith.constant 0 : index
    %3 = vector.load %arg3[%c0_3, %c0_4] : memref<1x128xf32, #tpu.memory_space<vmem>>, vector<1x128xf32>
    %4 = vector.broadcast %3 : vector<1x128xf32> to vector<128x128xf32>
    %5 = arith.addf %2, %4 : vector<128x128xf32>
    %cst_5 = arith.constant 0.000000e+00 : f32
    %6 = vector.broadcast %cst_5 : f32 to vector<128x128xf32>
    %7 = arith.maximumf %5, %6 : vector<128x128xf32>
    %c0_6 = arith.constant 0 : index
    %c0_7 = arith.constant 0 : index
    %8 = vector.load %arg2[%c0_6, %c0_7] : memref<128x128xf32, #tpu.memory_space<vmem>>, vector<128x128xf32>
    %cst_8 = arith.constant dense<0.000000e+00> : vector<128x128xf32>
    %9 = tpu.matmul %7, %8, %cst_8 {dimension_numbers = #tpu.dot_dimension_numbers<[1], [0], [0], [1], [0, 0, 1, 1], [], []>} : vector<128x128xf32>, vector<128x128xf32>, vector<128x128xf32> -> vector<128x128xf32>
    %c0_9 = arith.constant 0 : index
    %c0_10 = arith.constant 0 : index
    %10 = vector.load %arg0[%c0_9, %c0_10] : memref<128x128xf32, #tpu.memory_space<vmem>>, vector<128x128xf32>
    %cst_11 = arith.constant dense<0.000000e+00> : vector<128x128xf32>
    %11 = tpu.matmul %10, %9, %cst_11 {dimension_numbers = #tpu.dot_dimension_numbers<[1], [0], [0], [1], [0, 0, 1, 1], [], []>} : vector<128x128xf32>, vector<128x128xf32>, vector<128x128xf32> -> vector<128x128xf32>
    %c0_12 = arith.constant 0 : index
    %c0_13 = arith.constant 0 : index
    %12 = vector.load %arg4[%c0_12, %c0_13] : memref<1x128xf32, #tpu.memory_space<vmem>>, vector<1x128xf32>
    %13 = vector.broadcast %12 : vector<1x128xf32> to vector<128x128xf32>
    %14 = arith.addf %11, %13 : vector<128x128xf32>
    %c0_14 = arith.constant 0 : index
    %c0_15 = arith.constant 0 : index
    %15 = vector.load %arg5[%c0_14, %c0_15] : memref<128x128xf32, #tpu.memory_space<vmem>>, vector<128x128xf32>
    tpu.vector_store %arg5[%c0_14, %c0_15], %14 {strides = array<i32>} : memref<128x128xf32, #tpu.memory_space<vmem>>, vector<128x128xf32>,
    return
  }
}

</mosaic_0001>

<llo_original>
// kernel: tpu_custom_call.1
$region0: #{tpu_custom_call.1}
  #allocation0 [shape = 'u32[]', space=smem, size = 0x4, offset = 0x4, fixed_abs, tag = 'smem constant byte address 0x4 - core index']
  #allocation1 [shape = 'u32[72,128]{1,0:T(1,128)}', space=vmem, size = 0x9000, scoped, tag = 'internal scratch']
  %s0 = inlined_call_operand.hbm [shape: f32[128,128], index: 0, kind: input, shape index: {}]
  %s1 = inlined_call_operand.hbm [shape: f32[128,128], index: 1, kind: input, shape index: {}]
  %s2 = inlined_call_operand.hbm [shape: f32[128,128], index: 2, kind: input, shape index: {}]
  %s3 = inlined_call_operand.vmem [shape: f32[1,128], index: 3, kind: input, shape index: {}]
  %s4 = inlined_call_operand.vmem [shape: f32[1,128], index: 4, kind: input, shape index: {}]
  %s5 = inlined_call_operand.hbm [shape: f32[128,128], index: 5, kind: output, shape index: {}]
  %s6 = sld [smem:[#allocation0]]
  $region42: #{tpu_custom_call.1} parent=0
    _
  %s8 = ssub.s32 1, %s6
  %s9 = scalar_select 0, %s8, %s6
  $region1: #{tpu_custom_call.1} parent=0
    #allocation2 [shape = 'u8[65536]{0}', space=vmem, size = 0x10000, scoped, tag = 'input window, operand 0, single buffered']
    #allocation3 [shape = 's32[1]{0}', space=sflag, size = 0x4, scoped, tag = 'scoped memory for tpu_custom_call.1']
    #allocation4 [shape = 's32[1]{0}', space=sflag, size = 0x4, scoped, tag = 'scoped memory for tpu_custom_call.1']
    #allocation5 [shape = 'u8[65536]{0}', space=vmem, size = 0x10000, scoped, tag = 'input window, operand 1, single buffered']
    #allocation6 [shape = 's32[1]{0}', space=sflag, size = 0x4, scoped, tag = 'scoped memory for tpu_custom_call.1']
    #allocation7 [shape = 'u8[65536]{0}', space=vmem, size = 0x10000, scoped, tag = 'input window, operand 2, single buffered']
    #allocation8 [shape = 'u8[65536]{0}', space=vmem, size = 0x10000, scoped, tag = 'output window, operand 0, single buffered']
    %10 = vsyncpa [#allocation3], 0
    %11 = vsyncpa [#allocation6], 0
    %12 = vsyncpa [#allocation4], 0
    // Predicated region
    $region2: #{tpu_custom_call.1} parent=1 // pred_check
      _
    $region3: #{tpu_custom_call.1} parent=1 // pred_check_branch
      %14 = sbr.rel (0) target = $region5
    $region4: #{tpu_custom_call.1} parent=1 // pred_region
      %16 = vsyncadd [#allocation3], 0
      %s17 = sshll.u32 %s0, 4
      %s18 = int_to_ptr.hbm [resolvable:$true] %s17
      %s19 = sshll.u32 [#allocation2], 4
      %s20 = int_to_ptr.vmem [resolvable:$true] %s19
      %25 = dma.hbm_to_vmem [thread:$0]  %s18, 2048, %s20, [#allocation3], 128, 128, 8
    $region5: #{tpu_custom_call.1} parent=1 // pred_fallthru
      _
    // Predicated region
    $region6: #{tpu_custom_call.1} parent=1 // pred_check
      _
    $region7: #{tpu_custom_call.1} parent=1 // pred_check_branch
      %27 = sbr.rel (0) target = $region9
    $region8: #{tpu_custom_call.1} parent=1 // pred_region
      %29 = vsyncadd [#allocation6], 0
      %s30 = sshll.u32 %s1, 4
      %s31 = int_to_ptr.hbm [resolvable:$true] %s30
      %s32 = sshll.u32 [#allocation5], 4
      %s33 = int_to_ptr.vmem [resolvable:$true] %s32
      %38 = dma.hbm_to_vmem [thread:$0]  %s31, 2048, %s33, [#allocation6], 128, 128, 8
    $region9: #{tpu_custom_call.1} parent=1 // pred_fallthru
      _
    // Predicated region
    $region10: #{tpu_custom_call.1} parent=1 // pred_check
      _
    $region11: #{tpu_custom_call.1} parent=1 // pred_check_branch
      %40 = sbr.rel (0) target = $region13
    $region12: #{tpu_custom_call.1} parent=1 // pred_region
      %42 = vsyncadd [#allocation6], 0
      %s43 = sshll.u32 %s2, 4
      %s44 = int_to_ptr.hbm [resolvable:$true] %s43
      %s45 = sshll.u32 [#allocation7], 4
      %s46 = int_to_ptr.vmem [resolvable:$true] %s45
      %51 = dma.hbm_to_vmem [thread:$0]  %s44, 2048, %s46, [#allocation6], 128, 128, 8
    $region13: #{tpu_custom_call.1} parent=1 // pred_fallthru
      _
    // Predicated region
    $region14: #{tpu_custom_call.1} parent=1 // pred_check
      _
    $region15: #{tpu_custom_call.1} parent=1 // pred_check_branch
      %53 = sbr.rel (0) target = $region17
    $region16: #{tpu_custom_call.1} parent=1 // pred_region
      _
    $region17: #{tpu_custom_call.1} parent=1 // pred_fallthru
      _
    // Predicated region
    $region18: #{tpu_custom_call.1} parent=1 // pred_check
      _
    $region19: #{tpu_custom_call.1} parent=1 // pred_check_branch
      %55 = sbr.rel (0) target = $region21
    $region20: #{tpu_custom_call.1} parent=1 // pred_region
      _
    $region21: #{tpu_custom_call.1} parent=1 // pred_fallthru
      _
    // Predicated region
    $region22: #{tpu_custom_call.1} parent=1 // pred_check
      _
    $region23: #{tpu_custom_call.1} parent=1 // pred_check_branch
      %57 = sbr.rel (0) target = $region25
    $region24: #{tpu_custom_call.1} parent=1 // pred_region
      %59 = dma.done [#allocation3], 2048
    $region25: #{tpu_custom_call.1} parent=1 // pred_fallthru
      _
    // Predicated region
    $region26: #{tpu_custom_call.1} parent=1 // pred_check
      _
    $region27: #{tpu_custom_call.1} parent=1 // pred_check_branch
      %61 = sbr.rel (0) target = $region29
    $region28: #{tpu_custom_call.1} parent=1 // pred_region
      %63 = dma.done [#allocation6], 2048
    $region29: #{tpu_custom_call.1} parent=1 // pred_fallthru
      _
    // Predicated region
    $region30: #{tpu_custom_call.1} parent=1 // pred_check
      _
    $region31: #{tpu_custom_call.1} parent=1 // pred_check_branch
      %65 = sbr.rel (0) target = $region33
    $region32: #{tpu_custom_call.1} parent=1 // pred_region
      %67 = dma.done [#allocation6], 2048
    $region33: #{tpu_custom_call.1} parent=1 // pred_fallthru
      _
    %v68 = vld [vmem:[#allocation2] sm:$0xff]
    %v69 = vld [vmem:[#allocation2 + $0x8] sm:$0xff]
    %v70 = vld [vmem:[#allocation2 + $0x10] sm:$0xff]
    %v71 = vld [vmem:[#allocation2 + $0x18] sm:$0xff]
    %v72 = vld [vmem:[#allocation2 + $0x20] sm:$0xff]
    %v73 = vld [vmem:[#allocation2 + $0x28] sm:$0xff]
    %v74 = vld [vmem:[#allocation2 + $0x30] sm:$0xff]
    %v75 = vld [vmem:[#allocation2 + $0x38] sm:$0xff]
    %v76 = vld [vmem:[#allocation2 + $0x40] sm:$0xff]
    %v77 = vld [vmem:[#allocation2 + $0x48] sm:$0xff]
    %v78 = vld [vmem:[#allocation2 + $0x50] sm:$0xff]
    %v79 = vld [vmem:[#allocation2 + $0x58] sm:$0xff]
    %v80 = vld [vmem:[#allocation2 + $0x60] sm:$0xff]
    %v81 = vld [vmem:[#allocation2 + $0x68] sm:$0xff]
    %v82 = vld [vmem:[#allocation2 + $0x70] sm:$0xff]
    %v83 = vld [vmem:[#allocation2 + $0x78] sm:$0xff]
    %v84 = vld [vmem:[#allocation5] sm:$0xff]
    %v85 = vld [vmem:[#allocation5 + $0x8] sm:$0xff]
    %v86 = vld [vmem:[#allocation5 + $0x10] sm:$0xff]
    %v87 = vld [vmem:[#allocation5 + $0x18] sm:$0xff]
    %v88 = vld [vmem:[#allocation5 + $0x20] sm:$0xff]
    %v89 = vld [vmem:[#allocation5 + $0x28] sm:$0xff]
    %v90 = vld [vmem:[#allocation5 + $0x30] sm:$0xff]
    %v91 = vld [vmem:[#allocation5 + $0x38] sm:$0xff]
    %v92 = vld [vmem:[#allocation5 + $0x40] sm:$0xff]
    %v93 = vld [vmem:[#allocation5 + $0x48] sm:$0xff]
    %v94 = vld [vmem:[#allocation5 + $0x50] sm:$0xff]
    %v95 = vld [vmem:[#allocation5 + $0x58] sm:$0xff]
    %v96 = vld [vmem:[#allocation5 + $0x60] sm:$0xff]
    %v97 = vld [vmem:[#allocation5 + $0x68] sm:$0xff]
    %v98 = vld [vmem:[#allocation5 + $0x70] sm:$0xff]
    %v99 = vld [vmem:[#allocation5 + $0x78] sm:$0xff]
    %v100 = vld [vmem:[%s3] sm:$0x1]
    %v102 = vperm.slane %v100, 0
    %104 = vmatpush.msra.mxu0 %v99
    %105 = vmatpush.msra.mxu0 %v98
    %106 = vmatpush.msra.mxu0 %v97
    %107 = vmatpush.msra.mxu0 %v96
    %108 = vmatpush.msra.mxu0 %v95
    %109 = vmatpush.msra.mxu0 %v94
    %110 = vmatpush.msra.mxu0 %v93
    %111 = vmatpush.msra.mxu0 %v92
    %112 = vmatpush.msra.mxu0 %v91
    %113 = vmatpush.msra.mxu0 %v90
    %114 = vmatpush.msra.mxu0 %v89
    %115 = vmatpush.msra.mxu0 %v88
    %116 = vmatpush.msra.mxu0 %v87
    %117 = vmatpush.msra.mxu0 %v86
    %118 = vmatpush.msra.mxu0 %v85
    %119 = vmatpush.msra.mxu0 %v84
    %120 = vmatmul.f32.gmra.mxu0 %v68
    %v121 = vpop.f32.mrf.mxu0
    %v122 = vadd.f32 %v102, %v121
    %123 = vmatmul.f32.gmra.mxu0 %v69
    %v124 = vpop.f32.mrf.mxu0
    %v125 = vadd.f32 %v102, %v124
    %126 = vmatmul.f32.gmra.mxu0 %v70
    %v127 = vpop.f32.mrf.mxu0
    %v128 = vadd.f32 %v102, %v127
    %129 = vmatmul.f32.gmra.mxu0 %v71
    %v130 = vpop.f32.mrf.mxu0
    %v131 = vadd.f32 %v102, %v130
    %132 = vmatmul.f32.gmra.mxu0 %v72
    %v133 = vpop.f32.mrf.mxu0
    %v134 = vadd.f32 %v102, %v133
    %135 = vmatmul.f32.gmra.mxu0 %v73
    %v136 = vpop.f32.mrf.mxu0
    %v137 = vadd.f32 %v102, %v136
    %138 = vmatmul.f32.gmra.mxu0 %v74
    %v139 = vpop.f32.mrf.mxu0
    %v140 = vadd.f32 %v102, %v139
    %141 = vmatmul.f32.gmra.mxu0 %v75
    %v142 = vpop.f32.mrf.mxu0
    %v143 = vadd.f32 %v102, %v142
    %144 = vmatmul.f32.gmra.mxu0 %v76
    %v145 = vpop.f32.mrf.mxu0
    %v146 = vadd.f32 %v102, %v145
    %147 = vmatmul.f32.gmra.mxu0 %v77
    %v148 = vpop.f32.mrf.mxu0
    %v149 = vadd.f32 %v102, %v148
    %150 = vmatmul.f32.gmra.mxu0 %v78
    %v151 = vpop.f32.mrf.mxu0
    %v152 = vadd.f32 %v102, %v151
    %153 = vmatmul.f32.gmra.mxu0 %v79
    %v154 = vpop.f32.mrf.mxu0
    %v155 = vadd.f32 %v102, %v154
    %156 = vmatmul.f32.gmra.mxu0 %v80
    %v157 = vpop.f32.mrf.mxu0
    %v158 = vadd.f32 %v102, %v157
    %159 = vmatmul.f32.gmra.mxu0 %v81
    %v160 = vpop.f32.mrf.mxu0
    %v161 = vadd.f32 %v102, %v160
    %162 = vmatmul.f32.gmra.mxu0 %v82
    %v163 = vpop.f32.mrf.mxu0
    %v164 = vadd.f32 %v102, %v163
    %165 = vmatmul.f32.gmra.mxu0 %v83
    %v166 = vpop.f32.mrf.mxu0
    %v167 = vadd.f32 %v102, %v166
    %168 = vdwg.mxu0
    %v169 = vmax.f32 %v122, 0.0
    %v170 = vmax.f32 %v125, 0.0
    %v171 = vmax.f32 %v128, 0.0
    %v172 = vmax.f32 %v131, 0.0
    %v173 = vmax.f32 %v134, 0.0
    %v174 = vmax.f32 %v137, 0.0
    %v175 = vmax.f32 %v140, 0.0
    %v176 = vmax.f32 %v143, 0.0
    %v177 = vmax.f32 %v146, 0.0
    %v178 = vmax.f32 %v149, 0.0
    %v179 = vmax.f32 %v152, 0.0
    %v180 = vmax.f32 %v155, 0.0
    %v181 = vmax.f32 %v158, 0.0
    %v182 = vmax.f32 %v161, 0.0
    %v183 = vmax.f32 %v164, 0.0
    %v184 = vmax.f32 %v167, 0.0
    %v185 = vld [vmem:[#allocation7] sm:$0xff]
    %v186 = vld [vmem:[#allocation7 + $0x8] sm:$0xff]
    %v187 = vld [vmem:[#allocation7 + $0x10] sm:$0xff]
    %v188 = vld [vmem:[#allocation7 + $0x18] sm:$0xff]
    %v189 = vld [vmem:[#allocation7 + $0x20] sm:$0xff]
    %v190 = vld [vmem:[#allocation7 + $0x28] sm:$0xff]
    %v191 = vld [vmem:[#allocation7 + $0x30] sm:$0xff]
    %v192 = vld [vmem:[#allocation7 + $0x38] sm:$0xff]
    %v193 = vld [vmem:[#allocation7 + $0x40] sm:$0xff]
    %v194 = vld [vmem:[#allocation7 + $0x48] sm:$0xff]
    %v195 = vld [vmem:[#allocation7 + $0x50] sm:$0xff]
    %v196 = vld [vmem:[#allocation7 + $0x58] sm:$0xff]
    %v197 = vld [vmem:[#allocation7 + $0x60] sm:$0xff]
    %v198 = vld [vmem:[#allocation7 + $0x68] sm:$0xff]
    %v199 = vld [vmem:[#allocation7 + $0x70] sm:$0xff]
    %v200 = vld [vmem:[#allocation7 + $0x78] sm:$0xff]
    %201 = vmatpush.msra.mxu0 %v200
    %202 = vmatpush.msra.mxu0 %v199
    %203 = vmatpush.msra.mxu0 %v198
    %204 = vmatpush.msra.mxu0 %v197
    %205 = vmatpush.msra.mxu0 %v196
    %206 = vmatpush.msra.mxu0 %v195
    %207 = vmatpush.msra.mxu0 %v194
    %208 = vmatpush.msra.mxu0 %v193
    %209 = vmatpush.msra.mxu0 %v192
    %210 = vmatpush.msra.mxu0 %v191
    %211 = vmatpush.msra.mxu0 %v190
    %212 = vmatpush.msra.mxu0 %v189
    %213 = vmatpush.msra.mxu0 %v188
    %214 = vmatpush.msra.mxu0 %v187
    %215 = vmatpush.msra.mxu0 %v186
    %216 = vmatpush.msra.mxu0 %v185
    %217 = vmatmul.f32.gmra.mxu0 %v169
    %v218 = vpop.f32.mrf.mxu0
    %v219 = vadd.f32 0.0, %v218
    %220 = vmatmul.f32.gmra.mxu0 %v170
    %v221 = vpop.f32.mrf.mxu0
    %v222 = vadd.f32 0.0, %v221
    %223 = vmatmul.f32.gmra.mxu0 %v171
    %v224 = vpop.f32.mrf.mxu0
    %v225 = vadd.f32 0.0, %v224
    %226 = vmatmul.f32.gmra.mxu0 %v172
    %v227 = vpop.f32.mrf.mxu0
    %v228 = vadd.f32 0.0, %v227
    %229 = vmatmul.f32.gmra.mxu0 %v173
    %v230 = vpop.f32.mrf.mxu0
    %v231 = vadd.f32 0.0, %v230
    %232 = vmatmul.f32.gmra.mxu0 %v174
    %v233 = vpop.f32.mrf.mxu0
    %v234 = vadd.f32 0.0, %v233
    %235 = vmatmul.f32.gmra.mxu0 %v175
    %v236 = vpop.f32.mrf.mxu0
    %v237 = vadd.f32 0.0, %v236
    %238 = vmatmul.f32.gmra.mxu0 %v176
    %v239 = vpop.f32.mrf.mxu0
    %v240 = vadd.f32 0.0, %v239
    %241 = vmatmul.f32.gmra.mxu0 %v177
    %v242 = vpop.f32.mrf.mxu0
    %v243 = vadd.f32 0.0, %v242
    %244 = vmatmul.f32.gmra.mxu0 %v178
    %v245 = vpop.f32.mrf.mxu0
    %v246 = vadd.f32 0.0, %v245
    %247 = vmatmul.f32.gmra.mxu0 %v179
    %v248 = vpop.f32.mrf.mxu0
    %v249 = vadd.f32 0.0, %v248
    %250 = vmatmul.f32.gmra.mxu0 %v180
    %v251 = vpop.f32.mrf.mxu0
    %v252 = vadd.f32 0.0, %v251
    %253 = vmatmul.f32.gmra.mxu0 %v181
    %v254 = vpop.f32.mrf.mxu0
    %v255 = vadd.f32 0.0, %v254
    %256 = vmatmul.f32.gmra.mxu0 %v182
    %v257 = vpop.f32.mrf.mxu0
    %v258 = vadd.f32 0.0, %v257
    %259 = vmatmul.f32.gmra.mxu0 %v183
    %v260 = vpop.f32.mrf.mxu0
    %v261 = vadd.f32 0.0, %v260
    %262 = vmatmul.f32.gmra.mxu0 %v184
    %v263 = vpop.f32.mrf.mxu0
    %v264 = vadd.f32 0.0, %v263
    %265 = vdwg.mxu0
    %v266 = vld [vmem:[%s4] sm:$0x1]
    %v268 = vperm.slane %v266, 0
    %270 = vmatpush.msra.mxu0 %v264
    %271 = vmatpush.msra.mxu0 %v261
    %272 = vmatpush.msra.mxu0 %v258
    %273 = vmatpush.msra.mxu0 %v255
    %274 = vmatpush.msra.mxu0 %v252
    %275 = vmatpush.msra.mxu0 %v249
    %276 = vmatpush.msra.mxu0 %v246
    %277 = vmatpush.msra.mxu0 %v243
    %278 = vmatpush.msra.mxu0 %v240
    %279 = vmatpush.msra.mxu0 %v237
    %280 = vmatpush.msra.mxu0 %v234
    %281 = vmatpush.msra.mxu0 %v231
    %282 = vmatpush.msra.mxu0 %v228
    %283 = vmatpush.msra.mxu0 %v225
    %284 = vmatpush.msra.mxu0 %v222
    %285 = vmatpush.msra.mxu0 %v219
    %286 = vmatmul.f32.gmra.mxu0 %v68
    %v287 = vpop.f32.mrf.mxu0
    %v288 = vadd.f32 %v268, %v287
    %289 = vmatmul.f32.gmra.mxu0 %v69
    %v290 = vpop.f32.mrf.mxu0
    %v291 = vadd.f32 %v268, %v290
    %292 = vmatmul.f32.gmra.mxu0 %v70
    %v293 = vpop.f32.mrf.mxu0
    %v294 = vadd.f32 %v268, %v293
    %295 = vmatmul.f32.gmra.mxu0 %v71
    %v296 = vpop.f32.mrf.mxu0
    %v297 = vadd.f32 %v268, %v296
    %298 = vmatmul.f32.gmra.mxu0 %v72
    %v299 = vpop.f32.mrf.mxu0
    %v300 = vadd.f32 %v268, %v299
    %301 = vmatmul.f32.gmra.mxu0 %v73
    %v302 = vpop.f32.mrf.mxu0
    %v303 = vadd.f32 %v268, %v302
    %304 = vmatmul.f32.gmra.mxu0 %v74
    %v305 = vpop.f32.mrf.mxu0
    %v306 = vadd.f32 %v268, %v305
    %307 = vmatmul.f32.gmra.mxu0 %v75
    %v308 = vpop.f32.mrf.mxu0
    %v309 = vadd.f32 %v268, %v308
    %310 = vmatmul.f32.gmra.mxu0 %v76
    %v311 = vpop.f32.mrf.mxu0
    %v312 = vadd.f32 %v268, %v311
    %313 = vmatmul.f32.gmra.mxu0 %v77
    %v314 = vpop.f32.mrf.mxu0
    %v315 = vadd.f32 %v268, %v314
    %316 = vmatmul.f32.gmra.mxu0 %v78
    %v317 = vpop.f32.mrf.mxu0
    %v318 = vadd.f32 %v268, %v317
    %319 = vmatmul.f32.gmra.mxu0 %v79
    %v320 = vpop.f32.mrf.mxu0
    %v321 = vadd.f32 %v268, %v320
    %322 = vmatmul.f32.gmra.mxu0 %v80
    %v323 = vpop.f32.mrf.mxu0
    %v324 = vadd.f32 %v268, %v323
    %325 = vmatmul.f32.gmra.mxu0 %v81
    %v326 = vpop.f32.mrf.mxu0
    %v327 = vadd.f32 %v268, %v326
    %328 = vmatmul.f32.gmra.mxu0 %v82
    %v329 = vpop.f32.mrf.mxu0
    %v330 = vadd.f32 %v268, %v329
    %331 = vmatmul.f32.gmra.mxu0 %v83
    %v332 = vpop.f32.mrf.mxu0
    %v333 = vadd.f32 %v268, %v332
    %334 = vdwg.mxu0
    %335 = vst [vmem:[#allocation8] sm:$0xff] %v288
    %336 = vst [vmem:[#allocation8 + $0x8] sm:$0xff] %v291
    %337 = vst [vmem:[#allocation8 + $0x10] sm:$0xff] %v294
    %338 = vst [vmem:[#allocation8 + $0x18] sm:$0xff] %v297
    %339 = vst [vmem:[#allocation8 + $0x20] sm:$0xff] %v300
    %340 = vst [vmem:[#allocation8 + $0x28] sm:$0xff] %v303
    %341 = vst [vmem:[#allocation8 + $0x30] sm:$0xff] %v306
    %342 = vst [vmem:[#allocation8 + $0x38] sm:$0xff] %v309
    %343 = vst [vmem:[#allocation8 + $0x40] sm:$0xff] %v312
    %344 = vst [vmem:[#allocation8 + $0x48] sm:$0xff] %v315
    %345 = vst [vmem:[#allocation8 + $0x50] sm:$0xff] %v318
    %346 = vst [vmem:[#allocation8 + $0x58] sm:$0xff] %v321
    %347 = vst [vmem:[#allocation8 + $0x60] sm:$0xff] %v324
    %348 = vst [vmem:[#allocation8 + $0x68] sm:$0xff] %v327
    %349 = vst [vmem:[#allocation8 + $0x70] sm:$0xff] %v330
    %350 = vst [vmem:[#allocation8 + $0x78] sm:$0xff] %v333
    // Predicated region
    $region34: #{tpu_custom_call.1} parent=1 // pred_check
      _
    $region35: #{tpu_custom_call.1} parent=1 // pred_check_branch
      %352 = sbr.rel (0) target = $region37
    $region36: #{tpu_custom_call.1} parent=1 // pred_region
      %354 = vsyncadd [#allocation4], 0
      %s355 = sshll.u32 [#allocation8], 4
      %s356 = int_to_ptr.vmem [resolvable:$true] %s355
      %s357 = sshll.u32 %s5, 4
      %s358 = int_to_ptr.hbm [resolvable:$true] %s357
      %363 = dma.vmem_to_hbm [thread:$0]  %s356, 2048, %s358, [#allocation4], 128, 128, 8
    $region37: #{tpu_custom_call.1} parent=1 // pred_fallthru
      _
    // Predicated region
    $region38: #{tpu_custom_call.1} parent=1 // pred_check
      _
    $region39: #{tpu_custom_call.1} parent=1 // pred_check_branch
      %365 = sbr.rel (0) target = $region41
    $region40: #{tpu_custom_call.1} parent=1 // pred_region
      %367 = dma.done [#allocation4], 2048
    $region41: #{tpu_custom_call.1} parent=1 // pred_fallthru
      _
    %368 = vsyncpa [#allocation3], 1
    %369 = vsyncpa [#allocation6], 1
    %370 = vsyncpa [#allocation4], 1

</llo_original>
